<compile_context>
chip_gen: v6e
topology: v6e:2x2x1
jax: 0.10.0
libtpu: 0.0.40
codegen_flags: <defaults>
</compile_context>

<pallas_src>
import functools

import jax
import jax.numpy as jnp
from jax.experimental import pallas as pl
from jax.experimental.pallas import tpu as pltpu


# --------------------------------------------------------------------------
# Kernels
# --------------------------------------------------------------------------

def _bn_fused_kernel(eps, inv_count, x_ref, w_ref, b_ref, y_ref, mu_ref, var_ref):
    """Single sweep: per-channel stats + normalize on a resident (N, tc, HW) slab."""
    x = x_ref[...]
    # f32-accumulating reductions; no explicit f32 copy of the slab.
    s = jnp.sum(jnp.sum(x, axis=2, keepdims=True, dtype=jnp.float32),
                axis=0, keepdims=True)                                  # (1, tc, 1)
    sq = jnp.sum(jnp.sum(x * x, axis=2, keepdims=True, dtype=jnp.float32),
                 axis=0, keepdims=True)                                 # (1, tc, 1)
    mean = s * inv_count
    var = jnp.maximum(sq * inv_count - mean * mean, 0.0)                # biased var
    mu_ref[...] = mean
    var_ref[...] = var

    inv = pl.reciprocal(jnp.sqrt(var) + eps, approx=False)
    scale = w_ref[...].astype(jnp.float32) * inv
    shift = b_ref[...].astype(jnp.float32) - mean * scale
    y = x.astype(jnp.float32) * scale + shift
    y_ref[...] = y.astype(y_ref.dtype)


def _bn_stats_kernel(eps, inv_count, tn_f, thw_f, hw_valid_f,
                     x_ref, w_ref, b_ref,
                     mu_ref, var_ref, scale_ref, shift_ref,
                     mean_acc, m2_acc):
    """Streams (tn, tc, thw) tiles; Chan-merges per-tile (sum, sumsq) stats.

    Handles zero-padded HW columns: padded zeros contribute nothing to the
    sums, and the per-tile valid-element count is computed exactly from the
    grid position (no equal-count assumption)."""
    ni = pl.program_id(1)
    hi = pl.program_id(2)

    @pl.when((ni == 0) & (hi == 0))
    def _init():
        mean_acc[...] = jnp.zeros_like(mean_acc)
        m2_acc[...] = jnp.zeros_like(m2_acc)

    x = x_ref[...]
    s = jnp.sum(jnp.sum(x, axis=2, keepdims=True, dtype=jnp.float32),
                axis=0, keepdims=True)                                  # (1, tc, 1)
    sq = jnp.sum(jnp.sum(x * x, axis=2, keepdims=True, dtype=jnp.float32),
                 axis=0, keepdims=True)                                 # (1, tc, 1)

    ni_f = ni.astype(jnp.float32)
    hi_f = hi.astype(jnp.float32)
    # Valid (non-padded) columns in this HW tile; >= 1 by construction.
    valid_cols = jnp.minimum(thw_f, hw_valid_f - hi_f * thw_f)
    n_b = tn_f * valid_cols                                   # elems in this tile
    n_a = tn_f * (ni_f * hw_valid_f + hi_f * thw_f)           # elems already merged
    n_tot = n_a + n_b

    tile_mean = s * (1.0 / n_b)
    tile_m2 = sq - n_b * tile_mean * tile_mean
    delta = tile_mean - mean_acc[...]
    mean_acc[...] = mean_acc[...] + delta * (n_b / n_tot)
    m2_acc[...] = m2_acc[...] + tile_m2 + (delta * delta) * (n_a * (n_b / n_tot))

    @pl.when((ni == pl.num_programs(1) - 1) & (hi == pl.num_programs(2) - 1))
    def _finalize():
        mu = mean_acc[...]
        var = jnp.maximum(m2_acc[...] * inv_count, 0.0)       # biased variance
        mu_ref[...] = mu
        var_ref[...] = var
        # Precompute the per-channel affine so pass 2 is a pure mul/add stream.
        inv = pl.reciprocal(jnp.sqrt(var) + eps, approx=False)
        scale = w_ref[...].astype(jnp.float32) * inv
        scale_ref[...] = scale
        shift_ref[...] = b_ref[...].astype(jnp.float32) - mu * scale


def _bn_norm_kernel(x_ref, scale_ref, shift_ref, y_ref):
    """y = scale * x + shift (f32 math, one cast in / one cast out)."""
    y = x_ref[...].astype(jnp.float32) * scale_ref[...] + shift_ref[...]
    y_ref[...] = y.astype(y_ref.dtype)


# --------------------------------------------------------------------------
# Host-side helpers
# --------------------------------------------------------------------------

def _vmem_budget():
    """Generation-aware (block_cap, fused_slab_cap, vmem_limit) in bytes."""
    phys = None
    try:
        info = pltpu.get_tpu_info()
        phys = getattr(info, "vmem_capacity_bytes", None)
    except Exception:
        phys = None
    if phys is not None and phys >= 96 * 1024 * 1024:
        # 128 MiB parts (v5e / v6e): bigger blocks amortize per-step overhead.
        return 8 * 1024 * 1024, 10 * 1024 * 1024, 64 * 1024 * 1024
    # v7x (64 MiB physical VMEM per TensorCore) or unknown: stay conservative.
    return 3 * 1024 * 1024, 6 * 1024 * 1024, 48 * 1024 * 1024


def _largest_divisor_multiple(dim, align, cap):
    """Largest divisor of `dim` that is a multiple of `align` and <= cap (0 if none)."""
    best = 0
    d = align
    limit = min(dim, max(align, cap))
    while d <= limit:
        if dim % d == 0:
            best = d
        d += align
    return best


def _largest_divisor(n, cap):
    best = 1
    for d in range(1, min(n, max(1, cap)) + 1):
        if n % d == 0:
            best = d
    return best


# --------------------------------------------------------------------------
# Forward pass
# --------------------------------------------------------------------------

def batch_norm_forward(x, weight, bias, running_mean, running_var,
                       eps=1e-5, momentum=0.1, *,
                       n_tile=None, hw_tile=None, force_two_pass=False):
    """Training-mode forward of `_BatchNorm` (NCHW input).

    Returns (y, mu, var, new_running_mean, new_running_var)."""
    N, C, H, W = x.shape
    HW = H * W
    M = N * HW
    itemsize = jnp.dtype(x.dtype).itemsize
    sublane = {4: 8, 2: 16, 1: 32}.get(itemsize, 8)
    lane = 128

    block_cap, fused_cap, vmem_limit = _vmem_budget()

    # Free reshapes (no HBM transpose): NCHW -> (N, C, H*W).
    x3 = x.reshape(N, C, HW)
    w3 = weight.reshape(1, C, 1)
    b3 = bias.reshape(1, C, 1)

    # Channel tile: the sublane quantum (gives C/tc parallel tiles for v7x's
    # two TensorCores); fall back to full C when C isn't a sublane multiple.
    tc = sublane if C % sublane == 0 else C
    c_tiles = C // tc

    slab_bytes = N * tc * HW * itemsize
    if slab_bytes <= fused_cap and not force_two_pass:
        # ---- fused single-sweep: x read once, y written once -------------
        y3, mu3, var3 = pl.pallas_call(
            functools.partial(_bn_fused_kernel, float(eps), 1.0 / float(M)),
            out_shape=(
                jax.ShapeDtypeStruct((N, C, HW), x.dtype),
                jax.ShapeDtypeStruct((1, C, 1), jnp.float32),
                jax.ShapeDtypeStruct((1, C, 1), jnp.float32),
            ),
            grid_spec=pltpu.PrefetchScalarGridSpec(
                num_scalar_prefetch=0,
                grid=(c_tiles,),
                in_specs=[
                    pl.BlockSpec((N, tc, HW), lambda ci: (0, ci, 0)),
                    pl.BlockSpec((1, tc, 1), lambda ci: (0, ci, 0)),
                    pl.BlockSpec((1, tc, 1), lambda ci: (0, ci, 0)),
                ],
                out_specs=[
                    pl.BlockSpec((N, tc, HW), lambda ci: (0, ci, 0)),
                    pl.BlockSpec((1, tc, 1), lambda ci: (0, ci, 0)),
                    pl.BlockSpec((1, tc, 1), lambda ci: (0, ci, 0)),
                ],
            ),
            compiler_params=pltpu.CompilerParams(
                dimension_semantics=("parallel",),
                vmem_limit_bytes=vmem_limit),
        )(x3, w3, b3)
    else:
        # ---- streamed two-pass path ---------------------------------------
        # Keep tiles lane-dense: zero-pad HW to a multiple of 128 if needed
        # (one extra XLA pad/crop pass; avoids a full-HW block blowing VMEM).
        if HW % lane != 0:
            HWp = ((HW + lane - 1) // lane) * lane
            x3s = jnp.pad(x3, ((0, 0), (0, 0), (0, HWp - HW)))
        else:
            HWp, x3s = HW, x3

        # Give the VMEM budget to thw first (long contiguous DMA runs), then
        # tile N through the grid with whatever budget remains.
        thw_budget = max(lane, block_cap // max(1, tc * itemsize))
        thw = hw_tile if hw_tile is not None else \
            _largest_divisor_multiple(HWp, lane, thw_budget)
        assert thw > 0 and HWp % thw == 0
        hw_tiles = HWp // thw

        tn_budget = max(1, block_cap // max(1, tc * thw * itemsize))
        tn = n_tile if n_tile is not None else _largest_divisor(N, tn_budget)
        assert N % tn == 0
        tn_tiles = N // tn

        # pass 1: per-channel mean / biased variance + fused scale/shift.
        mu3, var3, scale3, shift3 = pl.pallas_call(
            functools.partial(_bn_stats_kernel, float(eps), 1.0 / float(M),
                              float(tn), float(thw), float(HW)),
            out_shape=tuple(jax.ShapeDtypeStruct((1, C, 1), jnp.float32)
                            for _ in range(4)),
            grid_spec=pltpu.PrefetchScalarGridSpec(
                num_scalar_prefetch=0,
                grid=(c_tiles, tn_tiles, hw_tiles),
                in_specs=[
                    pl.BlockSpec((tn, tc, thw), lambda ci, ni, hi: (ni, ci, hi)),
                    pl.BlockSpec((1, tc, 1), lambda ci, ni, hi: (0, ci, 0)),
                    pl.BlockSpec((1, tc, 1), lambda ci, ni, hi: (0, ci, 0)),
                ],
                out_specs=[
                    pl.BlockSpec((1, tc, 1), lambda ci, ni, hi: (0, ci, 0))
                    for _ in range(4)
                ],
                scratch_shapes=[
                    pltpu.VMEM((1, tc, 1), jnp.float32),   # running mean
                    pltpu.VMEM((1, tc, 1), jnp.float32),   # running centered M2
                ],
            ),
            compiler_params=pltpu.CompilerParams(
                dimension_semantics=("parallel", "arbitrary", "arbitrary"),
                vmem_limit_bytes=vmem_limit),
        )(x3s, w3, b3)

        # pass 2: pure load -> mul/add -> store, fully parallel.
        y3p = pl.pallas_call(
            _bn_norm_kernel,
            out_shape=jax.ShapeDtypeStruct((N, C, HWp), x.dtype),
            grid_spec=pltpu.PrefetchScalarGridSpec(
                num_scalar_prefetch=0,
                grid=(c_tiles, tn_tiles, hw_tiles),
                in_specs=[
                    pl.BlockSpec((tn, tc, thw), lambda ci, ni, hi: (ni, ci, hi)),
                    pl.BlockSpec((1, tc, 1), lambda ci, ni, hi: (0, ci, 0)),
                    pl.BlockSpec((1, tc, 1), lambda ci, ni, hi: (0, ci, 0)),
                ],
                out_specs=pl.BlockSpec((tn, tc, thw),
                                       lambda ci, ni, hi: (ni, ci, hi)),
            ),
            compiler_params=pltpu.CompilerParams(
                dimension_semantics=("parallel", "parallel", "parallel"),
                vmem_limit_bytes=vmem_limit),
        )(x3s, scale3, shift3)
        y3 = y3p if HWp == HW else y3p[:, :, :HW]

    mu = mu3.reshape(C)
    var = var3.reshape(C)
    # Running-stats update (track_running_stats=True, training=True).  The
    # reference module blends the BIASED variance into running_var, kept as-is.
    new_rm = (1.0 - momentum) * running_mean + momentum * mu
    new_rv = (1.0 - momentum) * running_var + momentum * var

    y = y3.reshape(N, C, H, W)
    # TODO(synk): eval-mode branch (normalize by running stats) and the
    # num_batches_tracked counter are host-side trivia and are not kernelized.
    return y, mu, var, new_rm, new_rv


# --------------------------------------------------------------------------
# Self-test
# --------------------------------------------------------------------------

def _reference(x, weight, bias, running_mean, running_var, eps, momentum):
    """Pure-JAX reference of the exact module semantics."""
    N, C, H, W = x.shape
    x2d = jnp.transpose(x, (1, 0, 2, 3)).reshape(C, -1)
    mu_r = x2d.mean(axis=1)
    var_r = ((x2d - mu_r[:, None]) ** 2).mean(axis=1)          # biased
    y2d = (x2d - mu_r[:, None]) / (jnp.sqrt(var_r[:, None]) + eps)
    y2d = weight[:, None] * y2d + bias[:, None]
    y_r = jnp.transpose(y2d.reshape(C, N, H, W), (1, 0, 2, 3))
    rm_r = (1.0 - momentum) * running_mean + momentum * mu_r
    rv_r = (1.0 - momentum) * running_var + momentum * var_r
    return y_r, mu_r, var_r, rm_r, rv_r


if __name__ == "__main__":
    eps = 1e-5
    momentum = 0.1
    key = jax.random.PRNGKey(0)

    def check(shape, **kwargs):
        global key
        key, kx, kw = jax.random.split(key, 3)
        N, C, H, W = shape
        x = jax.random.normal(kx, shape, dtype=jnp.float32)
        weight = jax.random.uniform(kw, (C,), dtype=jnp.float32)   # U(0,1)
        bias = jnp.zeros((C,), dtype=jnp.float32)
        running_mean = jnp.zeros((C,), dtype=jnp.float32)
        running_var = jnp.ones((C,), dtype=jnp.float32)

        y, mu, var, new_rm, new_rv = batch_norm_forward(
            x, weight, bias, running_mean, running_var,
            eps=eps, momentum=momentum, **kwargs)
        jax.block_until_ready((y, mu, var, new_rm, new_rv))

        y_r, mu_r, var_r, rm_r, rv_r = _reference(
            x, weight, bias, running_mean, running_var, eps, momentum)

        assert y.shape == shape
        assert jnp.allclose(y, y_r, atol=1e-5, rtol=1e-5)
        assert jnp.allclose(mu, mu_r, atol=1e-5, rtol=1e-5)
        assert jnp.allclose(var, var_r, atol=1e-5, rtol=1e-5)
        assert jnp.allclose(new_rm, rm_r, atol=1e-6)
        assert jnp.allclose(new_rv, rv_r, atol=1e-6)

    # 1) fused single-sweep path (slab fits VMEM)
    check((2, 4, 16, 16))
    # 2) streamed two-pass, reduction tiled over HW
    check((2, 4, 16, 16), force_two_pass=True, hw_tile=128)
    # 3) streamed two-pass, reduction tiled over both N and HW
    check((2, 4, 16, 16), force_two_pass=True, hw_tile=128, n_tile=1)
    # 4) streamed two-pass with HW not a multiple of 128 (padded + masked counts)
    check((2, 4, 10, 10), force_two_pass=True)

    print("KERNEL_OK")
</pallas_src>

<mosaic_0001>
module attributes {stable_mosaic.version = 11 : i64} {
  func.func @_bn_fused_kernel(%arg0: i32, %arg1: memref<2x4x256xf32, #tpu.memory_space<vmem>>, %arg2: memref<1x4x1xf32, #tpu.memory_space<vmem>>, %arg3: memref<1x4x1xf32, #tpu.memory_space<vmem>>, %arg4: memref<2x4x256xf32, #tpu.memory_space<vmem>>, %arg5: memref<1x4x1xf32, #tpu.memory_space<vmem>>, %arg6: memref<1x4x1xf32, #tpu.memory_space<vmem>>) attributes {dimension_semantics = [#tpu.dimension_semantics<parallel>], iteration_bounds = array<i64: 1>, scalar_prefetch = 0 : i64, scratch_operands = 0 : i64, tpu.core_type = #tpu.core_type<tc>, window_params = [{transform_indices = @transform_0, window_bounds = array<i64: 2, 4, 256>}, {transform_indices = @transform_1, window_bounds = array<i64: 1, 4, 1>}, {transform_indices = @transform_2, window_bounds = array<i64: 1, 4, 1>}, {transform_indices = @transform_3, window_bounds = array<i64: 2, 4, 256>}, {transform_indices = @transform_4, window_bounds = array<i64: 1, 4, 1>}, {transform_indices = @transform_5, window_bounds = array<i64: 1, 4, 1>}]} {
    %c0 = arith.constant 0 : index
    %c0_0 = arith.constant 0 : index
    %c0_1 = arith.constant 0 : index
    %0 = vector.load %arg1[%c0, %c0_0, %c0_1] : memref<2x4x256xf32, #tpu.memory_space<vmem>>, vector<2x4x256xf32>
    %cst = arith.constant dense<0.000000e+00> : vector<2x4xf32>
    %1 = vector.multi_reduction <add>, %0, %cst [2] : vector<2x4x256xf32> to vector<2x4xf32>
    %2 = vector.shape_cast %1 : vector<2x4xf32> to vector<2x4x1xf32>
    %cst_2 = arith.constant dense<0.000000e+00> : vector<4x1xf32>
    %3 = vector.multi_reduction <add>, %2, %cst_2 [0] : vector<2x4x1xf32> to vector<4x1xf32>
    %4 = vector.shape_cast %3 : vector<4x1xf32> to vector<1x4x1xf32>
    %5 = arith.mulf %0, %0 : vector<2x4x256xf32>
    %cst_3 = arith.constant dense<0.000000e+00> : vector<2x4xf32>
    %6 = vector.multi_reduction <add>, %5, %cst_3 [2] : vector<2x4x256xf32> to vector<2x4xf32>
    %7 = vector.shape_cast %6 : vector<2x4xf32> to vector<2x4x1xf32>
    %cst_4 = arith.constant dense<0.000000e+00> : vector<4x1xf32>
    %8 = vector.multi_reduction <add>, %7, %cst_4 [0] : vector<2x4x1xf32> to vector<4x1xf32>
    %9 = vector.shape_cast %8 : vector<4x1xf32> to vector<1x4x1xf32>
    %cst_5 = arith.constant 0.001953125 : f32
    %10 = vector.broadcast %cst_5 : f32 to vector<1x4x1xf32>
    %11 = arith.mulf %4, %10 : vector<1x4x1xf32>
    %cst_6 = arith.constant 0.001953125 : f32
    %12 = vector.broadcast %cst_6 : f32 to vector<1x4x1xf32>
    %13 = arith.mulf %9, %12 : vector<1x4x1xf32>
    %14 = arith.mulf %11, %11 : vector<1x4x1xf32>
    %15 = arith.subf %13, %14 : vector<1x4x1xf32>
    %cst_7 = arith.constant 0.000000e+00 : f32
    %16 = vector.broadcast %cst_7 : f32 to vector<1x4x1xf32>
    %17 = arith.maximumf %15, %16 : vector<1x4x1xf32>
    %c0_8 = arith.constant 0 : index
    %c0_9 = arith.constant 0 : index
    %c0_10 = arith.constant 0 : index
    %18 = vector.load %arg5[%c0_8, %c0_9, %c0_10] : memref<1x4x1xf32, #tpu.memory_space<vmem>>, vector<1x4x1xf32>
    tpu.vector_store %arg5[%c0_8, %c0_9, %c0_10], %11 {strides = array<i32>} : memref<1x4x1xf32, #tpu.memory_space<vmem>>, vector<1x4x1xf32>,
    %c0_11 = arith.constant 0 : index
    %c0_12 = arith.constant 0 : index
    %c0_13 = arith.constant 0 : index
    %19 = vector.load %arg6[%c0_11, %c0_12, %c0_13] : memref<1x4x1xf32, #tpu.memory_space<vmem>>, vector<1x4x1xf32>
    tpu.vector_store %arg6[%c0_11, %c0_12, %c0_13], %17 {strides = array<i32>} : memref<1x4x1xf32, #tpu.memory_space<vmem>>, vector<1x4x1xf32>,
    %20 = math.sqrt %17 : vector<1x4x1xf32>
    %cst_14 = arith.constant 9.99999974E-6 : f32
    %21 = vector.broadcast %cst_14 : f32 to vector<1x4x1xf32>
    %22 = arith.addf %20, %21 : vector<1x4x1xf32>
    %23 = tpu.reciprocal %22 : vector<1x4x1xf32> -> vector<1x4x1xf32>
    %c0_15 = arith.constant 0 : index
    %c0_16 = arith.constant 0 : index
    %c0_17 = arith.constant 0 : index
    %24 = vector.load %arg2[%c0_15, %c0_16, %c0_17] : memref<1x4x1xf32, #tpu.memory_space<vmem>>, vector<1x4x1xf32>
    %25 = arith.mulf %24, %23 : vector<1x4x1xf32>
    %c0_18 = arith.constant 0 : index
    %c0_19 = arith.constant 0 : index
    %c0_20 = arith.constant 0 : index
    %26 = vector.load %arg3[%c0_18, %c0_19, %c0_20] : memref<1x4x1xf32, #tpu.memory_space<vmem>>, vector<1x4x1xf32>
    %27 = arith.mulf %11, %25 : vector<1x4x1xf32>
    %28 = arith.subf %26, %27 : vector<1x4x1xf32>
    %29 = vector.broadcast %25 : vector<1x4x1xf32> to vector<2x4x256xf32>
    %30 = arith.mulf %0, %29 : vector<2x4x256xf32>
    %31 = vector.broadcast %28 : vector<1x4x1xf32> to vector<2x4x256xf32>
    %32 = arith.addf %30, %31 : vector<2x4x256xf32>
    %c0_21 = arith.constant 0 : index
    %c0_22 = arith.constant 0 : index
    %c0_23 = arith.constant 0 : index
    %33 = vector.load %arg4[%c0_21, %c0_22, %c0_23] : memref<2x4x256xf32, #tpu.memory_space<vmem>>, vector<2x4x256xf32>
    tpu.vector_store %arg4[%c0_21, %c0_22, %c0_23], %32 {strides = array<i32>} : memref<2x4x256xf32, #tpu.memory_space<vmem>>, vector<2x4x256xf32>,
    return
  }
  func.func @transform_0(%arg0: i32) -> (i32, i32, i32) {
    %c0_i32 = arith.constant 0 : i32
    %c0_i32_0 = arith.constant 0 : i32
    %c0_i32_1 = arith.constant 0 : i32
    return %c0_i32, %arg0, %c0_i32_0 : i32, i32, i32
  }
  func.func @transform_1(%arg0: i32) -> (i32, i32, i32) {
    %c0_i32 = arith.constant 0 : i32
    %c0_i32_0 = arith.constant 0 : i32
    %c0_i32_1 = arith.constant 0 : i32
    return %c0_i32, %arg0, %c0_i32_0 : i32, i32, i32
  }
  func.func @transform_2(%arg0: i32) -> (i32, i32, i32) {
    %c0_i32 = arith.constant 0 : i32
    %c0_i32_0 = arith.constant 0 : i32
    %c0_i32_1 = arith.constant 0 : i32
    return %c0_i32, %arg0, %c0_i32_0 : i32, i32, i32
  }
  func.func @transform_3(%arg0: i32) -> (i32, i32, i32) {
    %c0_i32 = arith.constant 0 : i32
    %c0_i32_0 = arith.constant 0 : i32
    %c0_i32_1 = arith.constant 0 : i32
    return %c0_i32, %arg0, %c0_i32_0 : i32, i32, i32
  }
  func.func @transform_4(%arg0: i32) -> (i32, i32, i32) {
    %c0_i32 = arith.constant 0 : i32
    %c0_i32_0 = arith.constant 0 : i32
    %c0_i32_1 = arith.constant 0 : i32
    return %c0_i32, %arg0, %c0_i32_0 : i32, i32, i32
  }
  func.func @transform_5(%arg0: i32) -> (i32, i32, i32) {
    %c0_i32 = arith.constant 0 : i32
    %c0_i32_0 = arith.constant 0 : i32
    %c0_i32_1 = arith.constant 0 : i32
    return %c0_i32, %arg0, %c0_i32_0 : i32, i32, i32
  }
}

</mosaic_0001>

<llo_original>
// kernel: tpu_custom_call.1
$region0: #{tpu_custom_call.1}
  #allocation0 [shape = 'u32[]', space=smem, size = 0x4, offset = 0x4, fixed_abs, tag = 'smem constant byte address 0x4 - core index']
  #allocation1 [shape = 'u32[144,128]{1,0:T(1,128)}', space=vmem, size = 0x12000, scoped, tag = 'internal scratch']
  %s0 = inlined_call_operand.hbm [shape: f32[2,4,256], index: 0, kind: input, shape index: {}]
  %s1 = inlined_call_operand.vmem [shape: f32[1,4,1], index: 1, kind: input, shape index: {}]
  %s2 = inlined_call_operand.vmem [shape: f32[1,4,1], index: 2, kind: input, shape index: {}]
  %s3 = inlined_call_operand.hbm [shape: f32[2,4,256], index: 3, kind: output, shape index: {0}]
  %s4 = inlined_call_operand.vmem [shape: f32[1,4,1], index: 4, kind: output, shape index: {1}]
  %s5 = inlined_call_operand.vmem [shape: f32[1,4,1], index: 5, kind: output, shape index: {2}]
  %6 = xla_tuple %s3, %s4, %s5
  %s7 = sld [smem:[#allocation0]]
  $region42: #{tpu_custom_call.1} parent=0
    _
  %s9 = ssub.s32 1, %s7
  %s10 = scalar_select 0, %s9, %s7
  $region1: #{tpu_custom_call.1} parent=0
    #allocation2 [shape = 'u8[8192]{0}', space=vmem, size = 0x2000, scoped, tag = 'input window, operand 0, single buffered']
    #allocation3 [shape = 's32[1]{0}', space=sflag, size = 0x4, scoped, tag = 'scoped memory for tpu_custom_call.1']
    #allocation4 [shape = 's32[1]{0}', space=sflag, size = 0x4, scoped, tag = 'scoped memory for tpu_custom_call.1']
    #allocation5 [shape = 'u8[8192]{0}', space=vmem, size = 0x2000, scoped, tag = 'output window, operand 0, single buffered']
    %11 = vsyncpa [#allocation3], 0
    %12 = vsyncpa [#allocation4], 0
    // Predicated region
    $region2: #{tpu_custom_call.1} parent=1 // pred_check
      _
    $region3: #{tpu_custom_call.1} parent=1 // pred_check_branch
      %14 = sbr.rel (0) target = $region5
    $region4: #{tpu_custom_call.1} parent=1 // pred_region
      %s16 = ssub.s32 256, 256
      %17 = vsyncadd [#allocation3], %s16
      %s18 = sshll.u32 [#allocation2], 4
      %s19 = int_to_ptr.vmem [resolvable:$true] %s18
      %24 = dma.hbm_to_vmem [thread:$0]  %s0, 256, %s19, [#allocation3], 128, 128, 8
    $region5: #{tpu_custom_call.1} parent=1 // pred_fallthru
      _
    // Predicated region
    $region6: #{tpu_custom_call.1} parent=1 // pred_check
      _
    $region7: #{tpu_custom_call.1} parent=1 // pred_check_branch
      %26 = sbr.rel (0) target = $region9
    $region8: #{tpu_custom_call.1} parent=1 // pred_region
      _
    $region9: #{tpu_custom_call.1} parent=1 // pred_fallthru
      _
    // Predicated region
    $region10: #{tpu_custom_call.1} parent=1 // pred_check
      _
    $region11: #{tpu_custom_call.1} parent=1 // pred_check_branch
      %28 = sbr.rel (0) target = $region13
    $region12: #{tpu_custom_call.1} parent=1 // pred_region
      _
    $region13: #{tpu_custom_call.1} parent=1 // pred_fallthru
      _
    // Predicated region
    $region14: #{tpu_custom_call.1} parent=1 // pred_check
      _
    $region15: #{tpu_custom_call.1} parent=1 // pred_check_branch
      %30 = sbr.rel (0) target = $region17
    $region16: #{tpu_custom_call.1} parent=1 // pred_region
      %31 = dma.done [#allocation3], 256
    $region17: #{tpu_custom_call.1} parent=1 // pred_fallthru
      _
    %v32 = vld [vmem:[#allocation2] sm:$0xff]
    %v33 = vld [vmem:[#allocation2 + $0x8] sm:$0xff]
    %v36 = vcombine.high %v32, %v32
    %v37 = vcombine.high %v33, %v33
    %vm40 = vcmask 1043456
    %v41 = vsel %vm40, %v32, 0.0
    %v42 = vsel %vm40, %v36, 0.0
    %v43 = vadd.f32 %v41, %v42
    %44 = vadd.xlane.f32.xlu0 %v43
    %v45 = vpop.xlane.xlu0 %44
    %v46 = vsel %vm40, %v33, 0.0
    %v47 = vsel %vm40, %v37, 0.0
    %v48 = vadd.f32 %v46, %v47
    %49 = vadd.xlane.f32.xlu0 %v48
    %v50 = vpop.xlane.xlu0 %49
    %v51 = vsel %vm40, %v45, 0.0
    %v52 = vsel %vm40, %v50, 0.0
    %v53 = vadd.f32 %v51, %v52
    %v54 = vmul.f32 %v32, %v32
    %v55 = vmul.f32 %v33, %v33
    %v58 = vcombine.high %v54, %v54
    %v59 = vcombine.high %v55, %v55
    %v62 = vsel %vm40, %v54, 0.0
    %v63 = vsel %vm40, %v58, 0.0
    %v64 = vadd.f32 %v62, %v63
    %65 = vadd.xlane.f32.xlu0 %v64
    %v66 = vpop.xlane.xlu0 %65
    %v67 = vsel %vm40, %v55, 0.0
    %v68 = vsel %vm40, %v59, 0.0
    %v69 = vadd.f32 %v67, %v68
    %70 = vadd.xlane.f32.xlu0 %v69
    %v71 = vpop.xlane.xlu0 %70
    %v72 = vsel %vm40, %v66, 0.0
    %v73 = vsel %vm40, %v71, 0.0
    %v74 = vadd.f32 %v72, %v73
    %v75 = vmul.f32 %v53, 0.001953125
    %v76 = vmul.f32 %v74, 0.001953125
    %v77 = vmul.f32 %v75, %v75
    %v78 = vsub.f32 %v76, %v77
    %v79 = vmax.f32 %v78, 0.0
    %vm80 = vcmask 3072
    %81 = vst.msk [vmem:[%s4] sm:$0xf] %vm80, %v75
    %82 = vst.msk [vmem:[%s5] sm:$0xf] %vm80, %v79
    %v83 = vrsqrt.pop %v79
    %v84 = vmul.f32 %v79, %v83
    %vm85 = vcmp.eq.f32.partialorder %v79, inf
    %v86 = vsel %vm85, %v79, %v84
    %vm87 = vcmp.eq.f32.partialorder %v79, 0.0
    %v88 = vand.u32 %v79, 2147483648
    %v89 = vsel %vm87, %v88, %v86
    %v90 = vadd.f32 %v89, 1e-05
    %v91 = vrcp.pop %v90
    %v92 = vld [vmem:[%s1] sm:$0xf]
    %v93 = vmul.f32 %v92, %v91
    %v94 = vld [vmem:[%s2] sm:$0xf]
    %v95 = vmul.f32 %v75, %v93
    %v96 = vsub.f32 %v94, %v95
    %98 = vset.pattern.permute.xlu0 0
    %99 = vperm.xlu0 %98, %v93
    %v100 = vpop.permute.xlu0 %99
    %v102 = vunpack.c.l.s4 839922192
    %v103 = vunpack.c.0.s8 %v102
    %v104 = vlaneseq
    %v105 = vshrl.u32 %v104, 7
    %v106 = vsub.s32 %v103, %v105
    %v107 = vrot.slane %v100, %v106
    %v109 = vmul.f32 %v32, %v107
    %v110 = vmul.f32 %v33, %v107
    %112 = vset.pattern.permute.xlu0 0
    %113 = vperm.xlu0 %112, %v96
    %v114 = vpop.permute.xlu0 %113
    %v116 = vunpack.c.l.s4 839922192
    %v117 = vunpack.c.0.s8 %v116
    %v118 = vlaneseq
    %v119 = vshrl.u32 %v118, 7
    %v120 = vsub.s32 %v117, %v119
    %v121 = vrot.slane %v114, %v120
    %v123 = vadd.f32 %v109, %v121
    %v124 = vadd.f32 %v110, %v121
    %125 = vst [vmem:[#allocation5] sm:$0xff] %v123
    %126 = vst [vmem:[#allocation5 + $0x8] sm:$0xff] %v124
    // Predicated region
    $region18: #{tpu_custom_call.1} parent=1 // pred_check
      _
    $region19: #{tpu_custom_call.1} parent=1 // pred_check_branch
      %128 = sbr.rel (0) target = $region21
    $region20: #{tpu_custom_call.1} parent=1 // pred_region
      %s130 = ssub.s32 256, 256
      %131 = vsyncadd [#allocation4], %s130
      %s132 = sshll.u32 [#allocation5], 4
      %s133 = int_to_ptr.vmem [resolvable:$true] %s132
      %138 = dma.vmem_to_hbm [thread:$0]  %s133, 256, %s3, [#allocation4], 128, 128, 8
    $region21: #{tpu_custom_call.1} parent=1 // pred_fallthru
      _
    // Predicated region
    $region22: #{tpu_custom_call.1} parent=1 // pred_check
      _
    $region23: #{tpu_custom_call.1} parent=1 // pred_check_branch
      %140 = sbr.rel (0) target = $region25
    $region24: #{tpu_custom_call.1} parent=1 // pred_region
      _
    $region25: #{tpu_custom_call.1} parent=1 // pred_fallthru
      _
    // Predicated region
    $region26: #{tpu_custom_call.1} parent=1 // pred_check
      _
    $region27: #{tpu_custom_call.1} parent=1 // pred_check_branch
      %142 = sbr.rel (0) target = $region29
    $region28: #{tpu_custom_call.1} parent=1 // pred_region
      _
    $region29: #{tpu_custom_call.1} parent=1 // pred_fallthru
      _
    // Predicated region
    $region30: #{tpu_custom_call.1} parent=1 // pred_check
      _
    $region31: #{tpu_custom_call.1} parent=1 // pred_check_branch
      %144 = sbr.rel (0) target = $region33
    $region32: #{tpu_custom_call.1} parent=1 // pred_region
      %145 = dma.done [#allocation4], 256
    $region33: #{tpu_custom_call.1} parent=1 // pred_fallthru
      _
    // Predicated region
    $region34: #{tpu_custom_call.1} parent=1 // pred_check
      _
    $region35: #{tpu_custom_call.1} parent=1 // pred_check_branch
      %147 = sbr.rel (0) target = $region37
    $region36: #{tpu_custom_call.1} parent=1 // pred_region
      _
    $region37: #{tpu_custom_call.1} parent=1 // pred_fallthru
      _
    // Predicated region
    $region38: #{tpu_custom_call.1} parent=1 // pred_check
      _
    $region39: #{tpu_custom_call.1} parent=1 // pred_check_branch
      %149 = sbr.rel (0) target = $region41
    $region40: #{tpu_custom_call.1} parent=1 // pred_region
      _
    $region41: #{tpu_custom_call.1} parent=1 // pred_fallthru
      _
    %150 = vsyncpa [#allocation3], 1
    %151 = vsyncpa [#allocation4], 1

</llo_original>
